<compile_context>
chip_gen: v6e
topology: v6e:2x2x1
jax: 0.10.0
libtpu: 0.0.40
codegen_flags: <defaults>
</compile_context>

<pallas_src>
import functools
import math

import jax
import jax.numpy as jnp
from jax import lax
from jax.experimental import pallas as pl
from jax.experimental.pallas import tpu as pltpu


# --------------------------------------------------------------------------
# helpers
# --------------------------------------------------------------------------
def _pick_tile(dim, prefs):
    """Largest preferred tile that divides dim, else the full dim (small test)."""
    for p in prefs:
        if dim % p == 0:
            return p
    return dim


def _gelu_tanh(x):
    c = math.sqrt(2.0 / math.pi)
    return 0.5 * x * (1.0 + jnp.tanh(c * (x + 0.044715 * x * x * x)))


_VMEM_LIMIT = 32 * 1024 * 1024  # safe on v5e/v6e (128 MiB) and v7x (64 MiB)


# --------------------------------------------------------------------------
# Kernel 1: LayerNorm over the channel axis (rows tiled over M = B*T)
# --------------------------------------------------------------------------
def _layernorm_kernel(x_ref, g_ref, b_ref, o_ref, *, eps):
    x = x_ref[...].astype(jnp.float32)
    mean = jnp.mean(x, axis=-1, keepdims=True)
    xc = x - mean
    var = jnp.mean(xc * xc, axis=-1, keepdims=True)
    inv = lax.rsqrt(var + eps)
    o_ref[...] = (xc * inv * g_ref[...] + b_ref[...]).astype(o_ref.dtype)


def layernorm(x2d, gamma, beta, eps=1e-5):
    M, C = x2d.shape
    tm = _pick_tile(M, (256, 128))
    return pl.pallas_call(
        functools.partial(_layernorm_kernel, eps=eps),
        out_shape=jax.ShapeDtypeStruct((M, C), x2d.dtype),
        grid=(M // tm,),
        in_specs=[
            pl.BlockSpec((tm, C), lambda i: (i, 0)),
            pl.BlockSpec((1, C), lambda i: (0, 0)),
            pl.BlockSpec((1, C), lambda i: (0, 0)),
        ],
        out_specs=pl.BlockSpec((tm, C), lambda i: (i, 0)),
        compiler_params=pltpu.CompilerParams(
            dimension_semantics=("parallel",),
            vmem_limit_bytes=_VMEM_LIMIT,
        ),
    )(x2d, gamma.reshape(1, C), beta.reshape(1, C))


# --------------------------------------------------------------------------
# Kernel 2: tiled linear  y = act(x @ w + b) [+ residual]
#   bf16 MXU operands, f32 accumulation in VMEM scratch, K as inner loop.
# --------------------------------------------------------------------------
def _make_linear_kernel(activation, has_residual):
    def kernel(*refs):
        if has_residual:
            x_ref, w_ref, b_ref, r_ref, o_ref, acc_ref = refs
        else:
            x_ref, w_ref, b_ref, o_ref, acc_ref = refs
            r_ref = None
        k = pl.program_id(2)

        @pl.when(k == 0)
        def _():
            acc_ref[...] = jnp.zeros(acc_ref.shape, jnp.float32)

        acc_ref[...] += jnp.dot(
            x_ref[...].astype(jnp.bfloat16),
            w_ref[...].astype(jnp.bfloat16),
            preferred_element_type=jnp.float32,
        )

        @pl.when(k == pl.num_programs(2) - 1)
        def _():
            out = acc_ref[...] + b_ref[...].astype(jnp.float32)
            if activation == "gelu_tanh":
                out = _gelu_tanh(out)
            if has_residual:
                out = out + r_ref[...].astype(jnp.float32)
            o_ref[...] = out.astype(o_ref.dtype)

    return kernel


def linear(x2d, w, b, *, residual=None, activation=None):
    """x2d: (M, K), w: (K, N) (already transposed from PyTorch layout), b: (N,)."""
    M, K = x2d.shape
    K2, N = w.shape
    assert K == K2
    tm = _pick_tile(M, (256, 128))
    tn = _pick_tile(N, (512, 256, 128))
    tk = _pick_tile(K, (512, 256, 128))
    grid = (M // tm, N // tn, K // tk)

    in_specs = [
        pl.BlockSpec((tm, tk), lambda i, j, k: (i, k)),
        pl.BlockSpec((tk, tn), lambda i, j, k: (k, j)),
        pl.BlockSpec((1, tn), lambda i, j, k: (0, j)),
    ]
    args = [x2d, w, b.reshape(1, N)]
    if residual is not None:
        in_specs.append(pl.BlockSpec((tm, tn), lambda i, j, k: (i, j)))
        args.append(residual)

    kernel = _make_linear_kernel(activation, residual is not None)
    return pl.pallas_call(
        kernel,
        out_shape=jax.ShapeDtypeStruct((M, N), x2d.dtype),
        grid=grid,
        in_specs=in_specs,
        out_specs=pl.BlockSpec((tm, tn), lambda i, j, k: (i, j)),
        scratch_shapes=[pltpu.VMEM((tm, tn), jnp.float32)],
        compiler_params=pltpu.CompilerParams(
            dimension_semantics=("parallel", "parallel", "arbitrary"),
            vmem_limit_bytes=_VMEM_LIMIT,
        ),
    )(*args)


# --------------------------------------------------------------------------
# Kernel 3: flash-style causal attention, online softmax, causal tile skip
#   q, k, v: (B*H, T, hd)
# --------------------------------------------------------------------------
def _flash_attn_kernel(q_ref, k_ref, v_ref, o_ref, m_sc, l_sc, acc_sc,
                       *, scale, tq, tkv):
    qi = pl.program_id(1)
    ki = pl.program_id(2)
    q_start = qi * tq
    kv_start = ki * tkv

    @pl.when(ki == 0)
    def _():
        m_sc[...] = jnp.full(m_sc.shape, -1e30, jnp.float32)
        l_sc[...] = jnp.zeros(l_sc.shape, jnp.float32)
        acc_sc[...] = jnp.zeros(acc_sc.shape, jnp.float32)

    # causal tile skip: compute only if some key index <= some query index
    @pl.when(kv_start <= q_start + (tq - 1))
    def _():
        # fold 1/sqrt(hd) into q (T*hd mults instead of T*T)
        q = (q_ref[0].astype(jnp.float32) * scale).astype(jnp.bfloat16)
        k = k_ref[0].astype(jnp.bfloat16)
        # contract last axes of q and k -> no explicit k.T relayout
        s = lax.dot_general(q, k, (((1,), (1,)), ((), ())),
                            preferred_element_type=jnp.float32)

        # TODO(synk): skip the mask entirely on interior (non-diagonal) kv tiles.
        row = q_start + lax.broadcasted_iota(jnp.int32, (tq, tkv), 0)
        col = kv_start + lax.broadcasted_iota(jnp.int32, (tq, tkv), 1)
        s = jnp.where(row >= col, s, -1e30)  # large finite negative (no NaN risk)

        m_prev = m_sc[...]
        m_new = jnp.maximum(m_prev, jnp.max(s, axis=-1, keepdims=True))
        alpha = jnp.exp(m_prev - m_new)
        p = jnp.exp(s - m_new)
        l_sc[...] = alpha * l_sc[...] + jnp.sum(p, axis=-1, keepdims=True)
        acc_sc[...] = alpha * acc_sc[...] + jnp.dot(
            p.astype(jnp.bfloat16), v_ref[0].astype(jnp.bfloat16),
            preferred_element_type=jnp.float32)
        m_sc[...] = m_new

    @pl.when(ki == pl.num_programs(2) - 1)
    def _():
        o_ref[0] = (acc_sc[...] * pl.reciprocal(l_sc[...], approx=True)
                    ).astype(o_ref.dtype)


def flash_causal_attention(q, k, v):
    """q, k, v: (B*H, T, hd) -> (B*H, T, hd), causal softmax(q k^T / sqrt(hd)) v."""
    BH, T, hd = q.shape
    tq = _pick_tile(T, (256, 128))
    tkv = _pick_tile(T, (256, 128))
    scale = 1.0 / math.sqrt(hd)
    kernel = functools.partial(_flash_attn_kernel, scale=scale, tq=tq, tkv=tkv)
    q_spec = pl.BlockSpec((1, tq, hd), lambda bh, qi, ki: (bh, qi, 0))
    kv_spec = pl.BlockSpec((1, tkv, hd), lambda bh, qi, ki: (bh, ki, 0))
    return pl.pallas_call(
        kernel,
        out_shape=jax.ShapeDtypeStruct((BH, T, hd), q.dtype),
        grid=(BH, T // tq, T // tkv),
        in_specs=[q_spec, kv_spec, kv_spec],
        out_specs=q_spec,
        scratch_shapes=[
            pltpu.VMEM((tq, 1), jnp.float32),   # running max m
            pltpu.VMEM((tq, 1), jnp.float32),   # running denom l
            pltpu.VMEM((tq, hd), jnp.float32),  # output accumulator
        ],
        compiler_params=pltpu.CompilerParams(
            dimension_semantics=("parallel", "parallel", "arbitrary"),
            vmem_limit_bytes=_VMEM_LIMIT,
        ),
    )(q, k, v)


# --------------------------------------------------------------------------
# Full Block forward (glue in JAX, hot paths in Pallas)
# --------------------------------------------------------------------------
def block_forward(x, params, n_head):
    B, T, C = x.shape
    hd = C // n_head
    M = B * T
    x2d = x.reshape(M, C)

    # ---- x = x + attn(ln_1(x)) ----
    h = layernorm(x2d, params["ln1_g"], params["ln1_b"])
    qkv = linear(h, params["attn_w_qkv"], params["attn_b_qkv"])  # (M, 3C)

    # head split: qkv layout along 3C is [q | k | v], each C = H*hd
    # TODO(synk): express the head gather via BlockSpec index_maps over a
    #             (B, T, H, hd) layout instead of these JAX transposes.
    qkv = qkv.reshape(B, T, 3, n_head, hd)
    q = qkv[:, :, 0].transpose(0, 2, 1, 3).reshape(B * n_head, T, hd)
    k = qkv[:, :, 1].transpose(0, 2, 1, 3).reshape(B * n_head, T, hd)
    v = qkv[:, :, 2].transpose(0, 2, 1, 3).reshape(B * n_head, T, hd)

    y = flash_causal_attention(q, k, v)                           # (B*H, T, hd)
    y = y.reshape(B, n_head, T, hd).transpose(0, 2, 1, 3).reshape(M, C)

    # c_proj fused with residual add
    x2d = linear(y, params["attn_w_proj"], params["attn_b_proj"], residual=x2d)

    # ---- x = x + mlp(ln_2(x)) ----
    h = layernorm(x2d, params["ln2_g"], params["ln2_b"])
    h = linear(h, params["mlp_w_fc"], params["mlp_b_fc"], activation="gelu_tanh")
    x2d = linear(h, params["mlp_w_proj"], params["mlp_b_proj"], residual=x2d)

    return x2d.reshape(B, T, C)


# --------------------------------------------------------------------------
# Pure-JAX f32 reference (correctness check only)
# --------------------------------------------------------------------------
def _reference_block(x, params, n_head):
    B, T, C = x.shape
    hd = C // n_head

    def ln(h, g, b):
        mu = h.mean(-1, keepdims=True)
        var = ((h - mu) ** 2).mean(-1, keepdims=True)
        return (h - mu) / jnp.sqrt(var + 1e-5) * g + b

    h = ln(x, params["ln1_g"], params["ln1_b"])
    qkv = h @ params["attn_w_qkv"] + params["attn_b_qkv"]
    q, k, v = jnp.split(qkv, 3, axis=2)
    q = q.reshape(B, T, n_head, hd).transpose(0, 2, 1, 3)
    k = k.reshape(B, T, n_head, hd).transpose(0, 2, 1, 3)
    v = v.reshape(B, T, n_head, hd).transpose(0, 2, 1, 3)
    s = jnp.einsum("bhqd,bhkd->bhqk", q, k) / math.sqrt(hd)
    mask = jnp.tril(jnp.ones((T, T), dtype=bool))
    s = jnp.where(mask, s, -jnp.inf)
    attn = jax.nn.softmax(s, axis=-1)
    y = jnp.einsum("bhqk,bhkd->bhqd", attn, v).transpose(0, 2, 1, 3).reshape(B, T, C)
    x = x + (y @ params["attn_w_proj"] + params["attn_b_proj"])

    h = ln(x, params["ln2_g"], params["ln2_b"])
    h = h @ params["mlp_w_fc"] + params["mlp_b_fc"]
    h = 0.5 * h * (1.0 + jnp.tanh(math.sqrt(2.0 / math.pi)
                                  * (h + 0.044715 * h ** 3)))
    x = x + (h @ params["mlp_w_proj"] + params["mlp_b_proj"])
    return x


if __name__ == "__main__":
    # Small, module-consistent shapes
    B, T, C, n_head = 2, 32, 32, 4

    key = jax.random.PRNGKey(0)
    keys = jax.random.split(key, 13)

    def lin_init(kw, kb, fan_in, fan_out):
        # nn.Linear-style uniform init; weight stored directly as (K, N)
        # (== PyTorch weight.T, transposed once at parameter-load time).
        bound = 1.0 / math.sqrt(fan_in)
        w = jax.random.uniform(kw, (fan_in, fan_out), jnp.float32, -bound, bound)
        b = jax.random.uniform(kb, (fan_out,), jnp.float32, -bound, bound)
        return w, b

    w_qkv, b_qkv = lin_init(keys[0], keys[1], C, 3 * C)
    w_proj, b_proj = lin_init(keys[2], keys[3], C, C)
    w_fc, b_fc = lin_init(keys[4], keys[5], C, 4 * C)
    w_proj2, b_proj2 = lin_init(keys[6], keys[7], 4 * C, C)

    params = {
        "ln1_g": 1.0 + 0.1 * jax.random.normal(keys[8], (C,), jnp.float32),
        "ln1_b": 0.1 * jax.random.normal(keys[9], (C,), jnp.float32),
        "ln2_g": 1.0 + 0.1 * jax.random.normal(keys[10], (C,), jnp.float32),
        "ln2_b": 0.1 * jax.random.normal(keys[11], (C,), jnp.float32),
        "attn_w_qkv": w_qkv, "attn_b_qkv": b_qkv,
        "attn_w_proj": w_proj, "attn_b_proj": b_proj,
        "mlp_w_fc": w_fc, "mlp_b_fc": b_fc,
        "mlp_w_proj": w_proj2, "mlp_b_proj": b_proj2,
    }

    x = jax.random.normal(keys[12], (B, T, C), jnp.float32)

    y = block_forward(x, params, n_head)
    y = jax.block_until_ready(y)

    y_ref = _reference_block(x, params, n_head)
    assert y.shape == (B, T, C)
    err = float(jnp.max(jnp.abs(y - y_ref)))
    # bf16 MXU operands + approx reciprocal -> compare with a loose tolerance
    assert jnp.allclose(y, y_ref, atol=5e-2, rtol=5e-2), f"mismatch, max|diff|={err}"

    print("KERNEL_OK")
</pallas_src>

<mosaic_0001>
module attributes {stable_mosaic.version = 11 : i64} {
  func.func @_layernorm_kernel(%arg0: i32, %arg1: memref<64x32xf32, #tpu.memory_space<vmem>>, %arg2: memref<1x32xf32, #tpu.memory_space<vmem>>, %arg3: memref<1x32xf32, #tpu.memory_space<vmem>>, %arg4: memref<64x32xf32, #tpu.memory_space<vmem>>) attributes {dimension_semantics = [#tpu.dimension_semantics<parallel>], iteration_bounds = array<i64: 1>, scalar_prefetch = 0 : i64, scratch_operands = 0 : i64, tpu.core_type = #tpu.core_type<tc>, window_params = [{transform_indices = @transform_0, window_bounds = array<i64: 64, 32>}, {pipeline_mode = #tpu.pipeline_mode<synchronous>, transform_indices = @transform_1, window_bounds = array<i64: 1, 32>}, {pipeline_mode = #tpu.pipeline_mode<synchronous>, transform_indices = @transform_2, window_bounds = array<i64: 1, 32>}, {transform_indices = @transform_3, window_bounds = array<i64: 64, 32>}]} {
    %c0 = arith.constant 0 : index
    %c0_0 = arith.constant 0 : index
    %0 = vector.load %arg1[%c0, %c0_0] : memref<64x32xf32, #tpu.memory_space<vmem>>, vector<64x32xf32>
    %cst = arith.constant dense<0.000000e+00> : vector<64xf32>
    %1 = vector.multi_reduction <add>, %0, %cst [1] : vector<64x32xf32> to vector<64xf32>
    %2 = vector.shape_cast %1 : vector<64xf32> to vector<64x1xf32>
    %cst_1 = arith.constant 3.200000e+01 : f32
    %3 = vector.broadcast %cst_1 : f32 to vector<64x1xf32>
    %4 = arith.divf %2, %3 : vector<64x1xf32>
    %5 = vector.broadcast %4 : vector<64x1xf32> to vector<64x32xf32>
    %6 = arith.subf %0, %5 : vector<64x32xf32>
    %7 = arith.mulf %6, %6 : vector<64x32xf32>
    %cst_2 = arith.constant dense<0.000000e+00> : vector<64xf32>
    %8 = vector.multi_reduction <add>, %7, %cst_2 [1] : vector<64x32xf32> to vector<64xf32>
    %9 = vector.shape_cast %8 : vector<64xf32> to vector<64x1xf32>
    %cst_3 = arith.constant 3.200000e+01 : f32
    %10 = vector.broadcast %cst_3 : f32 to vector<64x1xf32>
    %11 = arith.divf %9, %10 : vector<64x1xf32>
    %cst_4 = arith.constant 9.99999974E-6 : f32
    %12 = vector.broadcast %cst_4 : f32 to vector<64x1xf32>
    %13 = arith.addf %11, %12 : vector<64x1xf32>
    %14 = math.rsqrt %13 : vector<64x1xf32>
    %15 = vector.broadcast %14 : vector<64x1xf32> to vector<64x32xf32>
    %16 = arith.mulf %6, %15 : vector<64x32xf32>
    %c0_5 = arith.constant 0 : index
    %c0_6 = arith.constant 0 : index
    %17 = vector.load %arg2[%c0_5, %c0_6] : memref<1x32xf32, #tpu.memory_space<vmem>>, vector<1x32xf32>
    %18 = vector.broadcast %17 : vector<1x32xf32> to vector<64x32xf32>
    %19 = arith.mulf %16, %18 : vector<64x32xf32>
    %c0_7 = arith.constant 0 : index
    %c0_8 = arith.constant 0 : index
    %20 = vector.load %arg3[%c0_7, %c0_8] : memref<1x32xf32, #tpu.memory_space<vmem>>, vector<1x32xf32>
    %21 = vector.broadcast %20 : vector<1x32xf32> to vector<64x32xf32>
    %22 = arith.addf %19, %21 : vector<64x32xf32>
    %c0_9 = arith.constant 0 : index
    %c0_10 = arith.constant 0 : index
    %23 = vector.load %arg4[%c0_9, %c0_10] : memref<64x32xf32, #tpu.memory_space<vmem>>, vector<64x32xf32>
    tpu.vector_store %arg4[%c0_9, %c0_10], %22 {strides = array<i32>} : memref<64x32xf32, #tpu.memory_space<vmem>>, vector<64x32xf32>,
    return
  }
  func.func @transform_0(%arg0: i32) -> (i32, i32) {
    %c0_i32 = arith.constant 0 : i32
    %c0_i32_0 = arith.constant 0 : i32
    return %arg0, %c0_i32 : i32, i32
  }
  func.func @transform_1(%arg0: i32) -> (i32, i32) {
    %c0_i32 = arith.constant 0 : i32
    %c0_i32_0 = arith.constant 0 : i32
    %c0_i32_1 = arith.constant 0 : i32
    return %c0_i32, %c0_i32_0 : i32, i32
  }
  func.func @transform_2(%arg0: i32) -> (i32, i32) {
    %c0_i32 = arith.constant 0 : i32
    %c0_i32_0 = arith.constant 0 : i32
    %c0_i32_1 = arith.constant 0 : i32
    return %c0_i32, %c0_i32_0 : i32, i32
  }
  func.func @transform_3(%arg0: i32) -> (i32, i32) {
    %c0_i32 = arith.constant 0 : i32
    %c0_i32_0 = arith.constant 0 : i32
    return %arg0, %c0_i32 : i32, i32
  }
}

</mosaic_0001>

<llo_original>
// kernel: tpu_custom_call.1
$region0: #{tpu_custom_call.1}
  #allocation0 [shape = 'u32[]', space=smem, size = 0x4, offset = 0x4, fixed_abs, tag = 'smem constant byte address 0x4 - core index']
  #allocation1 [shape = 'u32[144,128]{1,0:T(1,128)}', space=vmem, size = 0x12000, scoped, tag = 'internal scratch']
  %s0 = inlined_call_operand.vmem [shape: f32[64,32], index: 0, kind: input, shape index: {}]
  %s1 = inlined_call_operand.vmem [shape: f32[1,32], index: 1, kind: input, shape index: {}]
  %s2 = inlined_call_operand.vmem [shape: f32[1,32], index: 2, kind: input, shape index: {}]
  %s3 = inlined_call_operand.vmem [shape: f32[64,32], index: 3, kind: output, shape index: {}]
  %s4 = sld [smem:[#allocation0]]
  $region22: #{tpu_custom_call.1} parent=0
    _
  %s6 = ssub.s32 1, %s4
  %s7 = scalar_select 0, %s6, %s4
  // Predicated region
  $region2: #{tpu_custom_call.1} parent=0 // pred_check
    _
  $region3: #{tpu_custom_call.1} parent=0 // pred_check_branch
    %9 = sbr.rel (0) target = $region5
  $region4: #{tpu_custom_call.1} parent=0 // pred_region
    _
  $region5: #{tpu_custom_call.1} parent=0 // pred_fallthru
    _
  // Predicated region
  $region6: #{tpu_custom_call.1} parent=0 // pred_check
    _
  $region7: #{tpu_custom_call.1} parent=0 // pred_check_branch
    %11 = sbr.rel (0) target = $region9
  $region8: #{tpu_custom_call.1} parent=0 // pred_region
    _
  $region9: #{tpu_custom_call.1} parent=0 // pred_fallthru
    _
  // Predicated region
  $region10: #{tpu_custom_call.1} parent=0 // pred_check
    _
  $region11: #{tpu_custom_call.1} parent=0 // pred_check_branch
    %13 = sbr.rel (0) target = $region13
  $region12: #{tpu_custom_call.1} parent=0 // pred_region
    _
  $region13: #{tpu_custom_call.1} parent=0 // pred_fallthru
    _
  %v14 = vld [vmem:[%s0] sm:$0xff]
  %v15 = vld [vmem:[%s0 + $0x8] sm:$0xff]
  %v16 = vld [vmem:[%s0 + $0x10] sm:$0xff]
  %v17 = vld [vmem:[%s0 + $0x18] sm:$0xff]
  %v18 = vld [vmem:[%s0 + $0x20] sm:$0xff]
  %v19 = vld [vmem:[%s0 + $0x28] sm:$0xff]
  %v20 = vld [vmem:[%s0 + $0x30] sm:$0xff]
  %v21 = vld [vmem:[%s0 + $0x38] sm:$0xff]
  %vm22 = vcmask 261120
  %v23 = vsel %vm22, %v14, 0.0
  %24 = vadd.xlane.f32.xlu0 %v23
  %v25 = vpop.xlane.xlu0 %24
  %v26 = vsel %vm22, %v15, 0.0
  %27 = vadd.xlane.f32.xlu0 %v26
  %v28 = vpop.xlane.xlu0 %27
  %v29 = vsel %vm22, %v16, 0.0
  %30 = vadd.xlane.f32.xlu0 %v29
  %v31 = vpop.xlane.xlu0 %30
  %v32 = vsel %vm22, %v17, 0.0
  %33 = vadd.xlane.f32.xlu0 %v32
  %v34 = vpop.xlane.xlu0 %33
  %v35 = vsel %vm22, %v18, 0.0
  %36 = vadd.xlane.f32.xlu0 %v35
  %v37 = vpop.xlane.xlu0 %36
  %v38 = vsel %vm22, %v19, 0.0
  %39 = vadd.xlane.f32.xlu0 %v38
  %v40 = vpop.xlane.xlu0 %39
  %v41 = vsel %vm22, %v20, 0.0
  %42 = vadd.xlane.f32.xlu0 %v41
  %v43 = vpop.xlane.xlu0 %42
  %v44 = vsel %vm22, %v21, 0.0
  %45 = vadd.xlane.f32.xlu0 %v44
  %v46 = vpop.xlane.xlu0 %45
  %v47 = vrcp.pop 32.0
  %v48 = vmul.f32 %v25, %v47
  %v49 = vmul.f32 %v28, %v47
  %v50 = vmul.f32 %v31, %v47
  %v51 = vmul.f32 %v34, %v47
  %v52 = vmul.f32 %v37, %v47
  %v53 = vmul.f32 %v40, %v47
  %v54 = vmul.f32 %v43, %v47
  %v55 = vmul.f32 %v46, %v47
  %v56 = vsub.f32 %v14, %v48
  %v57 = vsub.f32 %v15, %v49
  %v58 = vsub.f32 %v16, %v50
  %v59 = vsub.f32 %v17, %v51
  %v60 = vsub.f32 %v18, %v52
  %v61 = vsub.f32 %v19, %v53
  %v62 = vsub.f32 %v20, %v54
  %v63 = vsub.f32 %v21, %v55
  %v64 = vmul.f32 %v56, %v56
  %v65 = vmul.f32 %v57, %v57
  %v66 = vmul.f32 %v58, %v58
  %v67 = vmul.f32 %v59, %v59
  %v68 = vmul.f32 %v60, %v60
  %v69 = vmul.f32 %v61, %v61
  %v70 = vmul.f32 %v62, %v62
  %v71 = vmul.f32 %v63, %v63
  %v72 = vsel %vm22, %v64, 0.0
  %73 = vadd.xlane.f32.xlu0 %v72
  %v74 = vpop.xlane.xlu0 %73
  %v75 = vsel %vm22, %v65, 0.0
  %76 = vadd.xlane.f32.xlu0 %v75
  %v77 = vpop.xlane.xlu0 %76
  %v78 = vsel %vm22, %v66, 0.0
  %79 = vadd.xlane.f32.xlu0 %v78
  %v80 = vpop.xlane.xlu0 %79
  %v81 = vsel %vm22, %v67, 0.0
  %82 = vadd.xlane.f32.xlu0 %v81
  %v83 = vpop.xlane.xlu0 %82
  %v84 = vsel %vm22, %v68, 0.0
  %85 = vadd.xlane.f32.xlu0 %v84
  %v86 = vpop.xlane.xlu0 %85
  %v87 = vsel %vm22, %v69, 0.0
  %88 = vadd.xlane.f32.xlu0 %v87
  %v89 = vpop.xlane.xlu0 %88
  %v90 = vsel %vm22, %v70, 0.0
  %91 = vadd.xlane.f32.xlu0 %v90
  %v92 = vpop.xlane.xlu0 %91
  %v93 = vsel %vm22, %v71, 0.0
  %94 = vadd.xlane.f32.xlu0 %v93
  %v95 = vpop.xlane.xlu0 %94
  %v96 = vmul.f32 %v74, %v47
  %v97 = vmul.f32 %v77, %v47
  %v98 = vmul.f32 %v80, %v47
  %v99 = vmul.f32 %v83, %v47
  %v100 = vmul.f32 %v86, %v47
  %v101 = vmul.f32 %v89, %v47
  %v102 = vmul.f32 %v92, %v47
  %v103 = vmul.f32 %v95, %v47
  %v104 = vadd.f32 %v96, 1e-05
  %v105 = vadd.f32 %v97, 1e-05
  %v106 = vadd.f32 %v98, 1e-05
  %v107 = vadd.f32 %v99, 1e-05
  %v108 = vadd.f32 %v100, 1e-05
  %v109 = vadd.f32 %v101, 1e-05
  %v110 = vadd.f32 %v102, 1e-05
  %v111 = vadd.f32 %v103, 1e-05
  %v112 = vrsqrt.pop %v104
  %v113 = vrsqrt.pop %v105
  %v114 = vrsqrt.pop %v106
  %v115 = vrsqrt.pop %v107
  %v116 = vrsqrt.pop %v108
  %v117 = vrsqrt.pop %v109
  %v118 = vrsqrt.pop %v110
  %v119 = vrsqrt.pop %v111
  %v120 = vmul.f32 %v56, %v112
  %v121 = vmul.f32 %v57, %v113
  %v122 = vmul.f32 %v58, %v114
  %v123 = vmul.f32 %v59, %v115
  %v124 = vmul.f32 %v60, %v116
  %v125 = vmul.f32 %v61, %v117
  %v126 = vmul.f32 %v62, %v118
  %v127 = vmul.f32 %v63, %v119
  %v128 = vld [vmem:[%s1] sm:$0x1]
  %v130 = vlaneseq
  %v131 = vshrl.u32 %v130, 7
  %v132 = vsub.s32 0, %v131
  %v133 = vrot.slane %v128, %v132
  %v135 = vmul.f32 %v120, %v133
  %v136 = vmul.f32 %v121, %v133
  %v137 = vmul.f32 %v122, %v133
  %v138 = vmul.f32 %v123, %v133
  %v139 = vmul.f32 %v124, %v133
  %v140 = vmul.f32 %v125, %v133
  %v141 = vmul.f32 %v126, %v133
  %v142 = vmul.f32 %v127, %v133
  %v143 = vld [vmem:[%s2] sm:$0x1]
  %v145 = vlaneseq
  %v146 = vshrl.u32 %v145, 7
  %v147 = vsub.s32 0, %v146
  %v148 = vrot.slane %v143, %v147
  %v150 = vadd.f32 %v135, %v148
  %v151 = vadd.f32 %v136, %v148
  %v152 = vadd.f32 %v137, %v148
  %v153 = vadd.f32 %v138, %v148
  %v154 = vadd.f32 %v139, %v148
  %v155 = vadd.f32 %v140, %v148
  %v156 = vadd.f32 %v141, %v148
  %v157 = vadd.f32 %v142, %v148
  %158 = vst.msk [vmem:[%s3] sm:$0xff] %vm22, %v150
  %159 = vst.msk [vmem:[%s3 + $0x8] sm:$0xff] %vm22, %v151
  %160 = vst.msk [vmem:[%s3 + $0x10] sm:$0xff] %vm22, %v152
  %161 = vst.msk [vmem:[%s3 + $0x18] sm:$0xff] %vm22, %v153
  %162 = vst.msk [vmem:[%s3 + $0x20] sm:$0xff] %vm22, %v154
  %163 = vst.msk [vmem:[%s3 + $0x28] sm:$0xff] %vm22, %v155
  %164 = vst.msk [vmem:[%s3 + $0x30] sm:$0xff] %vm22, %v156
  %165 = vst.msk [vmem:[%s3 + $0x38] sm:$0xff] %vm22, %v157
  // Predicated region
  $region14: #{tpu_custom_call.1} parent=0 // pred_check
    _
  $region15: #{tpu_custom_call.1} parent=0 // pred_check_branch
    %167 = sbr.rel (0) target = $region17
  $region16: #{tpu_custom_call.1} parent=0 // pred_region
    _
  $region17: #{tpu_custom_call.1} parent=0 // pred_fallthru
    _
  // Predicated region
  $region18: #{tpu_custom_call.1} parent=0 // pred_check
    _
  $region19: #{tpu_custom_call.1} parent=0 // pred_check_branch
    %169 = sbr.rel (0) target = $region21
  $region20: #{tpu_custom_call.1} parent=0 // pred_region
    _
  $region21: #{tpu_custom_call.1} parent=0 // pred_fallthru
    _

</llo_original>
